<compile_context>
chip_gen: v5e
topology: v5e:2x2
jax: 0.10.0
libtpu: 0.0.40
codegen_flags: <defaults>
</compile_context>

<pallas_src>
import functools

import jax
import jax.numpy as jnp
from jax.experimental import pallas as pl
from jax.experimental.pallas import tpu as pltpu


def _round_up(x, m):
    return ((x + m - 1) // m) * m


def _gather_mask(pred_shape, tgt, tile_idx, tb, batch, mask_rows):
    """One-hot mask selecting pred[i, target[i]] (and, if needed, valid rows)."""
    tbm, c = pred_shape
    class_ids = jax.lax.broadcasted_iota(jnp.int32, (tbm, c), 1)
    mask = class_ids == tgt                                   # broadcast compare
    if mask_rows:   # only emitted when the batch does not divide the tile
        row_ids = jax.lax.broadcasted_iota(jnp.int32, (tbm, c), 0) + tile_idx * tb
        mask = mask & (row_ids < batch)
    return mask


def _nll_kernel(pred_ref, target_ref, out_ref, acc_ref, *, inv_b, batch, tb, mask_rows):
    """Accumulate sum of pred[i, target[i]] over batch tiles; finalize mean NLL."""
    i = pl.program_id(0)

    @pl.when(i == 0)
    def _():
        acc_ref[0, 0] = jnp.float32(0.0)

    pred = pred_ref[...].astype(jnp.float32)                  # in-kernel cast
    tgt = target_ref[...]                                     # (TB, 1) int32
    mask = _gather_mask(pred.shape, tgt, i, tb, batch, mask_rows)
    acc_ref[0, 0] += jnp.sum(jnp.where(mask, pred, 0.0))      # single combined reduce

    @pl.when(i == pl.num_programs(0) - 1)
    def _():
        out_ref[0, 0] = -acc_ref[0, 0] * inv_b                # compile-time 1/B


def _fused_logsoftmax_nll_kernel(logits_ref, target_ref, out_ref, acc_ref, *,
                                 inv_b, batch, tb, mask_rows):
    """Fused log_softmax + NLL: consumes raw logits, log-probs never touch HBM."""
    i = pl.program_id(0)

    @pl.when(i == 0)
    def _():
        acc_ref[0, 0] = jnp.float32(0.0)

    x = logits_ref[...].astype(jnp.float32)                   # (TB, C)
    tgt = target_ref[...]                                     # (TB, 1) int32
    m = jnp.max(x, axis=1, keepdims=True)                     # row max (XLU)
    lse = jnp.log(jnp.sum(jnp.exp(x - m), axis=1, keepdims=True)) + m  # EUP exp/log
    mask = _gather_mask(x.shape, tgt, i, tb, batch, mask_rows)
    acc_ref[0, 0] += jnp.sum(jnp.where(mask, x - lse, 0.0))

    @pl.when(i == pl.num_programs(0) - 1)
    def _():
        out_ref[0, 0] = -acc_ref[0, 0] * inv_b


def _run(kernel_fn, rows, target, true_b):
    """Shared batch-tiled pallas_call launcher for both kernels."""
    b, c = rows.shape
    itemsize = jnp.dtype(rows.dtype).itemsize
    # Tile rows: multiple of 8 (sublane alignment); cap each tile around 2 MiB so
    # the double-buffered working set stays far below v7x's 32 MiB scoped-VMEM default.
    max_rows = max(8, ((2 * 1024 * 1024) // max(1, c * itemsize)) // 8 * 8)
    tb = min(_round_up(b, 8), max_rows)
    bp = _round_up(b, tb)
    mask_rows = bp != b
    if mask_rows:
        # Uncommon path: pad so every block is full; padded rows are masked out
        # in-kernel by the row-validity check (so padded values never contribute).
        rows = jnp.pad(rows, ((0, bp - b), (0, 0)))
        target = jnp.pad(target, (0, bp - b))
    target_2d = target.astype(jnp.int32).reshape(bp, 1)
    n_tiles = bp // tb

    kernel = functools.partial(kernel_fn, inv_b=1.0 / float(true_b),
                               batch=b, tb=tb, mask_rows=mask_rows)
    out = pl.pallas_call(
        kernel,
        out_shape=jax.ShapeDtypeStruct((1, 1), jnp.float32),
        grid_spec=pltpu.PrefetchScalarGridSpec(
            num_scalar_prefetch=0,
            grid=(n_tiles,),
            in_specs=[
                pl.BlockSpec((tb, c), lambda i: (i, 0)),   # pred/logits batch tiles
                pl.BlockSpec((tb, 1), lambda i: (i, 0)),   # matching target tiles
            ],
            out_specs=pl.BlockSpec(memory_space=pltpu.MemorySpace.SMEM),
            scratch_shapes=[pltpu.SMEM((1, 1), jnp.float32)],   # running sum across tiles
        ),
        compiler_params=pltpu.CompilerParams(
            dimension_semantics=("arbitrary",),   # shared accumulator across batch tiles
        ),
    )(rows, target_2d)
    return out[0, 0]


def get_loss(pred, target, trans_feat=None):
    """PyTorch get_loss.forward: F.nll_loss(pred, target) with pred = log-probs."""
    # trans_feat accepted for signature parity; unused by the reference forward.
    # TODO(synk): PyTorch's ignore_index=-100 (divide by non-ignored count) is not
    # modeled; all rows are assumed valid, matching the reference usage.
    b = pred.shape[0]
    return _run(_nll_kernel, pred, target, b)


def get_loss_from_logits(logits, target, trans_feat=None):
    """Perf variant: fused log_softmax + nll_loss (saves one (B, C) HBM round-trip)."""
    b = logits.shape[0]
    return _run(_fused_logsoftmax_nll_kernel, logits, target, b)


if __name__ == "__main__":
    key = jax.random.PRNGKey(0)
    k_logits, k_target, k_tf = jax.random.split(key, 3)

    B, NUM_CLASSES = 8, 40                       # PointNet++ cls: 40 classes
    logits = jax.random.normal(k_logits, (B, NUM_CLASSES), dtype=jnp.float32)
    pred = jax.nn.log_softmax(logits, axis=-1)   # nll_loss expects log-probs
    target = jax.random.randint(k_target, (B,), 0, NUM_CLASSES, dtype=jnp.int32)
    trans_feat = jax.random.normal(k_tf, (B, 3, 3), dtype=jnp.float32)  # unused

    # Module-equivalent path: nll_loss on log-probs.
    loss = jax.block_until_ready(get_loss(pred, target, trans_feat))
    ref = -jnp.mean(pred[jnp.arange(B), target])
    assert jnp.allclose(loss, ref, atol=1e-6), (loss, ref)

    # Fused perf variant: same result straight from logits.
    loss_fused = jax.block_until_ready(get_loss_from_logits(logits, target, trans_feat))
    assert jnp.allclose(loss_fused, ref, atol=1e-5), (loss_fused, ref)

    print("KERNEL_OK")
</pallas_src>

<mosaic_0001>
module attributes {stable_mosaic.version = 11 : i64} {
  func.func @_nll_kernel(%arg0: i32, %arg1: memref<8x40xf32, #tpu.memory_space<vmem>>, %arg2: memref<8x1xi32, #tpu.memory_space<vmem>>, %arg3: memref<1x1xf32, #tpu.memory_space<smem>>, %arg4: memref<1x1xf32, #tpu.memory_space<smem>>) attributes {dimension_semantics = [#tpu.dimension_semantics<arbitrary>], iteration_bounds = array<i64: 1>, scalar_prefetch = 0 : i64, scratch_operands = 1 : i64, tpu.core_type = #tpu.core_type<tc>, window_params = [{transform_indices = @transform_0, window_bounds = array<i64: 8, 40>}, {transform_indices = @transform_1, window_bounds = array<i64: 8, 1>}, {transform_indices = @transform_2, window_bounds = array<i64: 1, 1>}]} {
    %c0_i32 = arith.constant 0 : i32
    %0 = arith.cmpi eq, %arg0, %c0_i32 : i32
    %1 = arith.extui %0 : i1 to i32
    %c0_i32_0 = arith.constant 0 : i32
    %2 = arith.cmpi ne, %1, %c0_i32_0 : i32
    scf.if %2 {
      %cst_11 = arith.constant 0.000000e+00 : f32
      %c0_12 = arith.constant 0 : index
      %c0_13 = arith.constant 0 : index
      %20 = memref.load %arg4[%c0_12, %c0_13] : memref<1x1xf32, #tpu.memory_space<smem>>
      memref.store %cst_11, %arg4[%c0_12, %c0_13] : memref<1x1xf32, #tpu.memory_space<smem>>
    } else {
    }
    %c0 = arith.constant 0 : index
    %c0_1 = arith.constant 0 : index
    %3 = vector.load %arg1[%c0, %c0_1] : memref<8x40xf32, #tpu.memory_space<vmem>>, vector<8x40xf32>
    %c0_2 = arith.constant 0 : index
    %c0_3 = arith.constant 0 : index
    %4 = vector.load %arg2[%c0_2, %c0_3] : memref<8x1xi32, #tpu.memory_space<vmem>>, vector<8x1xi32>
    %5 = tpu.iota {dimensions = array<i32: 1>} : vector<8x40xi32>
    %6 = vector.broadcast %4 : vector<8x1xi32> to vector<8x40xi32>
    %7 = arith.cmpi eq, %5, %6 : vector<8x40xi32>
    %c0_4 = arith.constant 0 : index
    %c0_5 = arith.constant 0 : index
    %8 = memref.load %arg4[%c0_4, %c0_5] : memref<1x1xf32, #tpu.memory_space<smem>>
    %cst = arith.constant 0.000000e+00 : f32
    %9 = vector.broadcast %cst : f32 to vector<8x40xf32>
    %10 = arith.select %7, %3, %9 : vector<8x40xi1>, vector<8x40xf32>
    %11 = vector.shape_cast %10 : vector<8x40xf32> to vector<1x8x40xf32>
    %cst_6 = arith.constant dense<0.000000e+00> : vector<1xf32>
    %12 = vector.multi_reduction <add>, %11, %cst_6 [1, 2] : vector<1x8x40xf32> to vector<1xf32>
    %13 = vector.shape_cast %12 : vector<1xf32> to vector<1x1x1xf32>
    %14 = vector.extract %13[0, 0, 0] : f32 from vector<1x1x1xf32>
    %15 = arith.addf %8, %14 : f32
    %c0_7 = arith.constant 0 : index
    %c0_8 = arith.constant 0 : index
    %16 = memref.load %arg4[%c0_7, %c0_8] : memref<1x1xf32, #tpu.memory_space<smem>>
    memref.store %15, %arg4[%c0_7, %c0_8] : memref<1x1xf32, #tpu.memory_space<smem>>
    %c0_i32_9 = arith.constant 0 : i32
    %17 = arith.cmpi eq, %arg0, %c0_i32_9 : i32
    %18 = arith.extui %17 : i1 to i32
    %c0_i32_10 = arith.constant 0 : i32
    %19 = arith.cmpi ne, %18, %c0_i32_10 : i32
    scf.if %19 {
      %c0_11 = arith.constant 0 : index
      %c0_12 = arith.constant 0 : index
      %20 = memref.load %arg4[%c0_11, %c0_12] : memref<1x1xf32, #tpu.memory_space<smem>>
      %cst_13 = arith.constant 0.000000e+00 : f32
      %21 = arith.subf %cst_13, %20 : f32
      %cst_14 = arith.constant 1.250000e-01 : f32
      %22 = arith.mulf %21, %cst_14 : f32
      %c0_15 = arith.constant 0 : index
      %c0_16 = arith.constant 0 : index
      %23 = memref.load %arg3[%c0_15, %c0_16] : memref<1x1xf32, #tpu.memory_space<smem>>
      memref.store %22, %arg3[%c0_15, %c0_16] : memref<1x1xf32, #tpu.memory_space<smem>>
    } else {
    }
    return
  }
  func.func @transform_0(%arg0: i32) -> (i32, i32) {
    %c0_i32 = arith.constant 0 : i32
    %c0_i32_0 = arith.constant 0 : i32
    return %arg0, %c0_i32 : i32, i32
  }
  func.func @transform_1(%arg0: i32) -> (i32, i32) {
    %c0_i32 = arith.constant 0 : i32
    %c0_i32_0 = arith.constant 0 : i32
    return %arg0, %c0_i32 : i32, i32
  }
  func.func @transform_2(%arg0: i32) -> (i32, i32) {
    %c0_i32 = arith.constant 0 : i32
    %c0_i32_0 = arith.constant 0 : i32
    %c0_i32_1 = arith.constant 0 : i32
    return %c0_i32, %c0_i32_0 : i32, i32
  }
}

</mosaic_0001>

<llo_original>
// kernel: tpu_custom_call.1
$region0: #{tpu_custom_call.1}
  #allocation0 [shape = 'u32[]', space=smem, size = 0x4, offset = 0x4, fixed_abs, tag = 'smem constant byte address 0x4 - core index']
  #allocation1 [shape = 'u32[72,128]{1,0:T(1,128)}', space=vmem, size = 0x9000, scoped, tag = 'internal scratch']
  #allocation2 [shape = 'f32[1,1]{1,0:T(1,128)}', space=smem, size = 0x200, scoped, tag = 'scratch operand']
  %s0 = inlined_call_operand.vmem [shape: f32[8,40], index: 0, kind: input, shape index: {}]
  %s1 = inlined_call_operand.vmem [shape: s32[8,1], index: 1, kind: input, shape index: {}]
  %s2 = inlined_call_operand.hbm [shape: f32[1,1], index: 2, kind: output, shape index: {}]
  %s3 = sld [smem:[#allocation0]]
  $region26: #{tpu_custom_call.1} parent=0
    _
  %s5 = ssub.s32 1, %s3
  %s6 = scalar_select 0, %s5, %s3
  $region1: #{tpu_custom_call.1} parent=0
    #allocation3 [shape = 'u8[512]{0}', space=smem, size = 0x200, scoped, tag = 'output window, operand 0, single buffered']
    #allocation4 [shape = 's32[1]{0}', space=sflag, size = 0x4, scoped, tag = 'scoped memory for tpu_custom_call.1']
    %7 = vsyncpa [#allocation4], 0
    // Predicated region
    $region2: #{tpu_custom_call.1} parent=1 // pred_check
      _
    $region3: #{tpu_custom_call.1} parent=1 // pred_check_branch
      %9 = sbr.rel (0) target = $region5
    $region4: #{tpu_custom_call.1} parent=1 // pred_region
      _
    $region5: #{tpu_custom_call.1} parent=1 // pred_fallthru
      _
    // Predicated region
    $region6: #{tpu_custom_call.1} parent=1 // pred_check
      _
    $region7: #{tpu_custom_call.1} parent=1 // pred_check_branch
      %11 = sbr.rel (0) target = $region9
    $region8: #{tpu_custom_call.1} parent=1 // pred_region
      _
    $region9: #{tpu_custom_call.1} parent=1 // pred_fallthru
      _
    %p12 = scmp.eq.s32.totalorder 0, 0
    // Predicated region
    $region10: #{tpu_custom_call.1} parent=1 // pred_check
      %p13 = pneg %p12
    $region11: #{tpu_custom_call.1} parent=1 // pred_check_branch
      %15 = sbr.rel (%p13) target = $region13
    $region12: #{tpu_custom_call.1} parent=1 // pred_region
      %s16 = scalar_lea.smem [#allocation2], 0
      %17 = sst [smem:[%s16]] 0.0
    $region13: #{tpu_custom_call.1} parent=1 // pred_fallthru
      _
    %v18 = vld [vmem:[%s0] sm:$0xff]
    %v19 = vld [vmem:[%s1] sm:$0xff]
    %v20 = vlaneseq
    %v21 = vand.u32 %v20, 127
    %22 = vset.pattern.permute.xlu0 0
    %23 = vperm.xlu0 %22, %v19
    %v24 = vpop.permute.xlu0 %23
    %vm25 = vcmp.eq.s32.totalorder %v21, %v24
    %s26 = sld [smem:[#allocation2]]
    %v27 = vsel %vm25, %v18, 0.0
    %vm28 = vcmask 326656
    %v29 = vsel %vm28, %v27, 0.0
    %30 = vadd.xlane.f32.xlu0 %v29
    %v31 = vpop.xlane.xlu0 %30
    %v32 = vrot.slane %v31, 4
    %v33 = vadd.f32 %v31, %v32
    %v34 = vrot.slane %v33, 2
    %v35 = vadd.f32 %v33, %v34
    %v36 = vrot.slane %v35, 1
    %v37 = vadd.f32 %v35, %v36
    %s38 = vtos %v37
    %s39 = sadd.f32 %s26, %s38
    %s40 = scalar_lea.smem [#allocation2], 0
    %41 = sst [smem:[%s40]] %s39
    // Predicated region
    $region14: #{tpu_custom_call.1} parent=1 // pred_check
      %p42 = pneg %p12
    $region15: #{tpu_custom_call.1} parent=1 // pred_check_branch
      %44 = sbr.rel (%p42) target = $region17
    $region16: #{tpu_custom_call.1} parent=1 // pred_region
      %s45 = sld [smem:[#allocation2]]
      %s46 = ssub.f32 0.0, %s45
      %s47 = smul.f32 %s46, 0.125
      %s48 = scalar_lea.smem [#allocation3], 0
      %49 = sst [smem:[%s48]] %s47
    $region17: #{tpu_custom_call.1} parent=1 // pred_fallthru
      _
    // Predicated region
    $region18: #{tpu_custom_call.1} parent=1 // pred_check
      _
    $region19: #{tpu_custom_call.1} parent=1 // pred_check_branch
      %51 = sbr.rel (0) target = $region21
    $region20: #{tpu_custom_call.1} parent=1 // pred_region
      %53 = vsyncadd [#allocation4], 0
      %s55 = sshll.u32 %s2, 4
      %s56 = int_to_ptr.hbm [resolvable:$true] %s55
      %58 = dma.smem_to_hbm [#allocation3], 16, %s56, [#allocation4]
    $region21: #{tpu_custom_call.1} parent=1 // pred_fallthru
      _
    // Predicated region
    $region22: #{tpu_custom_call.1} parent=1 // pred_check
      _
    $region23: #{tpu_custom_call.1} parent=1 // pred_check_branch
      %60 = sbr.rel (0) target = $region25
    $region24: #{tpu_custom_call.1} parent=1 // pred_region
      %62 = dma.done [#allocation4], 16
    $region25: #{tpu_custom_call.1} parent=1 // pred_fallthru
      _
    %63 = sfence
    %64 = vsyncpa [#allocation4], 1

</llo_original>
